<compile_context>
chip_gen: v7x
topology: tpu7x:2x2x1
jax: 0.10.0
libtpu: 0.0.40
codegen_flags: <defaults>
</compile_context>

<pallas_src>
import math

import jax
import jax.numpy as jnp
from jax import lax
from jax.experimental import pallas as pl
from jax.experimental.pallas import tpu as pltpu


def encoder_kernel(a_ref, h_ref, w0_ref, wheads_ref, mu_ref, sigma_ref):
    a = a_ref[...]                                            # (N, N)
    d = jnp.maximum(jnp.sum(a, axis=-1, keepdims=True), 1.0)  # (N, 1)
    norm = lax.rsqrt(d)                                       # d ** -0.5

    def gcn(h, w):
        x = jnp.dot(h * norm, w, preferred_element_type=jnp.float32)  # fc (no bias)
        x = jnp.dot(a, x, preferred_element_type=jnp.float32)         # a @ h
        return x * norm

    # GCN0 with ReLU
    h0 = jnp.maximum(gcn(h_ref[...], w0_ref[...]), 0.0)       # (N, H)
    # Fused mu / log_sigma heads: single (H, 2D) matmul, then split.
    y = gcn(h0, wheads_ref[...])                              # (N, 2D)
    D = mu_ref.shape[-1]
    scale = D ** -0.25        # fold the 1/sqrt(D) decode scale into mu/sigma
    mu_ref[...] = y[:, :D] * scale
    sigma_ref[...] = jnp.exp(y[:, D:]) * scale


def decode_kernel(mu_ref, sigma_ref, eps_ref, out_ref):
    # mu/sigma are pre-scaled by D**-0.25, so z @ z^T equals
    # (mu + sigma*eps) @ (mu + sigma*eps)^T / sqrt(D).
    z = mu_ref[...] + sigma_ref[...] * eps_ref[...]           # (N, D)
    out_ref[...] = lax.dot_general(
        z, z,
        dimension_numbers=(((1,), (1,)), ((), ())),           # contract D, no transpose
        preferred_element_type=jnp.float32)


def vgae_forward(a, h, w0_t, wmu_t, wls_t, eps):
    """a: (N,N), h: (N,Fin), w*_t: (in,out) transposed Linear weights,
    eps: (S,N,D) standard-normal draws. Returns a_hat: (S,N,N)."""
    S, N, D = eps.shape
    w_heads = jnp.concatenate([wmu_t, wls_t], axis=1)         # (H, 2D)

    # Stage 1: sample-invariant encoder, computed exactly once.
    mu_s, sigma_s = pl.pallas_call(
        encoder_kernel,
        out_shape=(jax.ShapeDtypeStruct((N, D), jnp.float32),
                   jax.ShapeDtypeStruct((N, D), jnp.float32)),
    )(a, h, w0_t, w_heads)

    # Stage 2: per-sample reparameterization + decode, S as parallel grid axis.
    return pl.pallas_call(
        decode_kernel,
        out_shape=jax.ShapeDtypeStruct((S, N, N), jnp.float32),
        grid_spec=pltpu.PrefetchScalarGridSpec(
            num_scalar_prefetch=0,
            grid=(S,),
            in_specs=[
                pl.BlockSpec((N, D), lambda s: (0, 0)),            # mu_s
                pl.BlockSpec((N, D), lambda s: (0, 0)),            # sigma_s
                pl.BlockSpec((None, N, D), lambda s: (s, 0, 0)),   # eps[s], squeezed
            ],
            out_specs=pl.BlockSpec((None, N, N), lambda s: (s, 0, 0)),
        ),
        compiler_params=pltpu.CompilerParams(
            dimension_semantics=("parallel",)),
    )(mu_s, sigma_s, eps)


def xavier_uniform_t(key, in_features, out_features):
    # torch.nn.init.xavier_uniform_ on a Linear weight of shape (out, in);
    # we directly build the transposed (in, out) matrix used as h @ W^T.
    bound = math.sqrt(6.0 / (in_features + out_features))
    return jax.random.uniform(
        key, (in_features, out_features), jnp.float32, -bound, bound)


def vgae_reference(a, h, w0_t, wmu_t, wls_t, eps):
    d = jnp.maximum(jnp.sum(a, axis=-1, keepdims=True), 1.0)
    norm = d ** -0.5

    def gcn(x, w):
        return (a @ ((x * norm) @ w)) * norm

    h0 = jnp.maximum(gcn(h, w0_t), 0.0)
    mu = gcn(h0, wmu_t)
    sigma = jnp.exp(gcn(h0, wls_t))
    z = mu[None] + sigma[None] * eps                  # (S, N, D)
    return jnp.einsum("snd,smd->snm", z, z) / math.sqrt(z.shape[-1])


if __name__ == "__main__":
    N, IN_F, HID_F, OUT_F, N_SAMPLES = 128, 64, 32, 16, 2

    key = jax.random.PRNGKey(0)
    k_a, k_h, k_w0, k_wmu, k_wls, k_eps = jax.random.split(key, 6)

    # dense random adjacency (the PyTorch module densifies sparse `a` via @ anyway)
    a = (jax.random.uniform(k_a, (N, N)) < 0.2).astype(jnp.float32)
    h = jax.random.normal(k_h, (N, IN_F), jnp.float32)

    w0_t = xavier_uniform_t(k_w0, IN_F, HID_F)
    wmu_t = xavier_uniform_t(k_wmu, HID_F, OUT_F)
    wls_t = xavier_uniform_t(k_wls, HID_F, OUT_F)

    # reparameterization noise (eps of q_z.rsample((n_samples,)))
    eps = jax.random.normal(k_eps, (N_SAMPLES, N, OUT_F), jnp.float32)

    a_hat = vgae_forward(a, h, w0_t, wmu_t, wls_t, eps)
    a_hat = jax.block_until_ready(a_hat)

    a_hat_ref = vgae_reference(a, h, w0_t, wmu_t, wls_t, eps)
    assert a_hat.shape == (N_SAMPLES, N, N)
    assert jnp.allclose(a_hat, a_hat_ref, rtol=1e-4, atol=1e-4)

    print("KERNEL_OK")
</pallas_src>

<mosaic_0001>
module attributes {stable_mosaic.version = 11 : i64} {
  func.func @encoder_kernel(%arg0: memref<128x128xf32, #tpu.memory_space<vmem>>, %arg1: memref<128x64xf32, #tpu.memory_space<vmem>>, %arg2: memref<64x32xf32, #tpu.memory_space<vmem>>, %arg3: memref<32x32xf32, #tpu.memory_space<vmem>>, %arg4: memref<128x16xf32, #tpu.memory_space<vmem>>, %arg5: memref<128x16xf32, #tpu.memory_space<vmem>>) attributes {dimension_semantics = [], scalar_prefetch = 0 : i64, scratch_operands = 0 : i64, tpu.core_type = #tpu.core_type<tc>} {
    %c0 = arith.constant 0 : index
    %c0_0 = arith.constant 0 : index
    %0 = vector.load %arg0[%c0, %c0_0] : memref<128x128xf32, #tpu.memory_space<vmem>>, vector<128x128xf32>
    %cst = arith.constant dense<0.000000e+00> : vector<128xf32>
    %1 = vector.multi_reduction <add>, %0, %cst [1] : vector<128x128xf32> to vector<128xf32>
    %2 = vector.shape_cast %1 : vector<128xf32> to vector<128x1xf32>
    %cst_1 = arith.constant 1.000000e+00 : f32
    %3 = vector.broadcast %cst_1 : f32 to vector<128x1xf32>
    %4 = arith.maximumf %2, %3 : vector<128x1xf32>
    %5 = math.rsqrt %4 : vector<128x1xf32>
    %c0_2 = arith.constant 0 : index
    %c0_3 = arith.constant 0 : index
    %6 = vector.load %arg1[%c0_2, %c0_3] : memref<128x64xf32, #tpu.memory_space<vmem>>, vector<128x64xf32>
    %c0_4 = arith.constant 0 : index
    %c0_5 = arith.constant 0 : index
    %7 = vector.load %arg2[%c0_4, %c0_5] : memref<64x32xf32, #tpu.memory_space<vmem>>, vector<64x32xf32>
    %8 = vector.broadcast %5 : vector<128x1xf32> to vector<128x64xf32>
    %9 = arith.mulf %6, %8 : vector<128x64xf32>
    %cst_6 = arith.constant dense<0.000000e+00> : vector<128x32xf32>
    %10 = tpu.matmul %9, %7, %cst_6 {dimension_numbers = #tpu.dot_dimension_numbers<[1], [0], [0], [1], [0, 0, 1, 1], [], []>} : vector<128x64xf32>, vector<64x32xf32>, vector<128x32xf32> -> vector<128x32xf32>
    %cst_7 = arith.constant dense<0.000000e+00> : vector<128x32xf32>
    %11 = tpu.matmul %0, %10, %cst_7 {dimension_numbers = #tpu.dot_dimension_numbers<[1], [0], [0], [1], [0, 0, 1, 1], [], []>} : vector<128x128xf32>, vector<128x32xf32>, vector<128x32xf32> -> vector<128x32xf32>
    %12 = vector.broadcast %5 : vector<128x1xf32> to vector<128x32xf32>
    %13 = arith.mulf %11, %12 : vector<128x32xf32>
    %cst_8 = arith.constant 0.000000e+00 : f32
    %14 = vector.broadcast %cst_8 : f32 to vector<128x32xf32>
    %15 = arith.maximumf %13, %14 : vector<128x32xf32>
    %c0_9 = arith.constant 0 : index
    %c0_10 = arith.constant 0 : index
    %16 = vector.load %arg3[%c0_9, %c0_10] : memref<32x32xf32, #tpu.memory_space<vmem>>, vector<32x32xf32>
    %17 = vector.broadcast %5 : vector<128x1xf32> to vector<128x32xf32>
    %18 = arith.mulf %15, %17 : vector<128x32xf32>
    %cst_11 = arith.constant dense<0.000000e+00> : vector<128x32xf32>
    %19 = tpu.matmul %18, %16, %cst_11 {dimension_numbers = #tpu.dot_dimension_numbers<[1], [0], [0], [1], [0, 0, 1, 1], [], []>} : vector<128x32xf32>, vector<32x32xf32>, vector<128x32xf32> -> vector<128x32xf32>
    %cst_12 = arith.constant dense<0.000000e+00> : vector<128x32xf32>
    %20 = tpu.matmul %0, %19, %cst_12 {dimension_numbers = #tpu.dot_dimension_numbers<[1], [0], [0], [1], [0, 0, 1, 1], [], []>} : vector<128x128xf32>, vector<128x32xf32>, vector<128x32xf32> -> vector<128x32xf32>
    %21 = vector.broadcast %5 : vector<128x1xf32> to vector<128x32xf32>
    %22 = arith.mulf %20, %21 : vector<128x32xf32>
    %23 = vector.extract_strided_slice %22 {offsets = [0, 0], sizes = [128, 16], strides = [1, 1]} : vector<128x32xf32> to vector<128x16xf32>
    %cst_13 = arith.constant 5.000000e-01 : f32
    %24 = vector.broadcast %cst_13 : f32 to vector<128x16xf32>
    %25 = arith.mulf %23, %24 : vector<128x16xf32>
    %c0_14 = arith.constant 0 : index
    %c0_15 = arith.constant 0 : index
    %26 = vector.load %arg4[%c0_14, %c0_15] : memref<128x16xf32, #tpu.memory_space<vmem>>, vector<128x16xf32>
    tpu.vector_store %arg4[%c0_14, %c0_15], %25 {strides = array<i32>} : memref<128x16xf32, #tpu.memory_space<vmem>>, vector<128x16xf32>,
    %27 = vector.extract_strided_slice %22 {offsets = [0, 16], sizes = [128, 16], strides = [1, 1]} : vector<128x32xf32> to vector<128x16xf32>
    %28 = math.exp %27 : vector<128x16xf32>
    %cst_16 = arith.constant 5.000000e-01 : f32
    %29 = vector.broadcast %cst_16 : f32 to vector<128x16xf32>
    %30 = arith.mulf %28, %29 : vector<128x16xf32>
    %c0_17 = arith.constant 0 : index
    %c0_18 = arith.constant 0 : index
    %31 = vector.load %arg5[%c0_17, %c0_18] : memref<128x16xf32, #tpu.memory_space<vmem>>, vector<128x16xf32>
    tpu.vector_store %arg5[%c0_17, %c0_18], %30 {strides = array<i32>} : memref<128x16xf32, #tpu.memory_space<vmem>>, vector<128x16xf32>,
    return
  }
}

</mosaic_0001>

<llo_original>
// kernel: tpu_custom_call.1
$region0: #{tpu_custom_call.1}
  #allocation0 [shape = 'u32[]', space=smem, size = 0x4, offset = 0x4, fixed_abs, tag = 'smem constant byte address 0x4 - core index']
  #allocation1 [shape = 'u32[144,128]{1,0:T(1,128)}', space=vmem, size = 0x12000, scoped, tag = 'internal scratch']
  %s0 = inlined_call_operand.vmem [shape: f32[128,128], index: 0, kind: input, shape index: {}]
  %s1 = inlined_call_operand.vmem [shape: f32[128,64], index: 1, kind: input, shape index: {}]
  %s2 = inlined_call_operand.vmem [shape: f32[64,32], index: 2, kind: input, shape index: {}]
  %s3 = inlined_call_operand.vmem [shape: f32[32,32], index: 3, kind: input, shape index: {}]
  %s4 = inlined_call_operand.vmem [shape: f32[128,16], index: 4, kind: output, shape index: {0}]
  %s5 = inlined_call_operand.vmem [shape: f32[128,16], index: 5, kind: output, shape index: {1}]
  %6 = xla_tuple %s4, %s5
  %s7 = sld [smem:[#allocation0]]
  $region34: #{tpu_custom_call.1} parent=0
    _
  %s9 = ssub.s32 1, %s7
  %s10 = scalar_select 0, %s9, %s7
  // Predicated region
  $region2: #{tpu_custom_call.1} parent=0 // pred_check
    _
  $region3: #{tpu_custom_call.1} parent=0 // pred_check_branch
    %12 = sbr.rel (0) target = $region5
  $region4: #{tpu_custom_call.1} parent=0 // pred_region
    _
  $region5: #{tpu_custom_call.1} parent=0 // pred_fallthru
    _
  // Predicated region
  $region6: #{tpu_custom_call.1} parent=0 // pred_check
    _
  $region7: #{tpu_custom_call.1} parent=0 // pred_check_branch
    %14 = sbr.rel (0) target = $region9
  $region8: #{tpu_custom_call.1} parent=0 // pred_region
    _
  $region9: #{tpu_custom_call.1} parent=0 // pred_fallthru
    _
  // Predicated region
  $region10: #{tpu_custom_call.1} parent=0 // pred_check
    _
  $region11: #{tpu_custom_call.1} parent=0 // pred_check_branch
    %16 = sbr.rel (0) target = $region13
  $region12: #{tpu_custom_call.1} parent=0 // pred_region
    _
  $region13: #{tpu_custom_call.1} parent=0 // pred_fallthru
    _
  // Predicated region
  $region14: #{tpu_custom_call.1} parent=0 // pred_check
    _
  $region15: #{tpu_custom_call.1} parent=0 // pred_check_branch
    %18 = sbr.rel (0) target = $region17
  $region16: #{tpu_custom_call.1} parent=0 // pred_region
    _
  $region17: #{tpu_custom_call.1} parent=0 // pred_fallthru
    _
  %v19 = vld [vmem:[%s0] sm:$0xff]
  %v20 = vld [vmem:[%s0 + $0x8] sm:$0xff]
  %v21 = vld [vmem:[%s0 + $0x10] sm:$0xff]
  %v22 = vld [vmem:[%s0 + $0x18] sm:$0xff]
  %v23 = vld [vmem:[%s0 + $0x20] sm:$0xff]
  %v24 = vld [vmem:[%s0 + $0x28] sm:$0xff]
  %v25 = vld [vmem:[%s0 + $0x30] sm:$0xff]
  %v26 = vld [vmem:[%s0 + $0x38] sm:$0xff]
  %v27 = vld [vmem:[%s0 + $0x40] sm:$0xff]
  %v28 = vld [vmem:[%s0 + $0x48] sm:$0xff]
  %v29 = vld [vmem:[%s0 + $0x50] sm:$0xff]
  %v30 = vld [vmem:[%s0 + $0x58] sm:$0xff]
  %v31 = vld [vmem:[%s0 + $0x60] sm:$0xff]
  %v32 = vld [vmem:[%s0 + $0x68] sm:$0xff]
  %v33 = vld [vmem:[%s0 + $0x70] sm:$0xff]
  %v34 = vld [vmem:[%s0 + $0x78] sm:$0xff]
  %35 = vadd.xlane.f32.xlu0 %v19
  %v36 = vpop.xlane.xlu0 %35
  %37 = vadd.xlane.f32.xlu0 %v20
  %v38 = vpop.xlane.xlu0 %37
  %39 = vadd.xlane.f32.xlu0 %v21
  %v40 = vpop.xlane.xlu0 %39
  %41 = vadd.xlane.f32.xlu0 %v22
  %v42 = vpop.xlane.xlu0 %41
  %43 = vadd.xlane.f32.xlu0 %v23
  %v44 = vpop.xlane.xlu0 %43
  %45 = vadd.xlane.f32.xlu0 %v24
  %v46 = vpop.xlane.xlu0 %45
  %47 = vadd.xlane.f32.xlu0 %v25
  %v48 = vpop.xlane.xlu0 %47
  %49 = vadd.xlane.f32.xlu0 %v26
  %v50 = vpop.xlane.xlu0 %49
  %51 = vadd.xlane.f32.xlu0 %v27
  %v52 = vpop.xlane.xlu0 %51
  %53 = vadd.xlane.f32.xlu0 %v28
  %v54 = vpop.xlane.xlu0 %53
  %55 = vadd.xlane.f32.xlu0 %v29
  %v56 = vpop.xlane.xlu0 %55
  %57 = vadd.xlane.f32.xlu0 %v30
  %v58 = vpop.xlane.xlu0 %57
  %59 = vadd.xlane.f32.xlu0 %v31
  %v60 = vpop.xlane.xlu0 %59
  %61 = vadd.xlane.f32.xlu0 %v32
  %v62 = vpop.xlane.xlu0 %61
  %63 = vadd.xlane.f32.xlu0 %v33
  %v64 = vpop.xlane.xlu0 %63
  %65 = vadd.xlane.f32.xlu0 %v34
  %v66 = vpop.xlane.xlu0 %65
  %v67 = vmax.f32 %v36, 1.0
  %v68 = vmax.f32 %v38, 1.0
  %v69 = vmax.f32 %v40, 1.0
  %v70 = vmax.f32 %v42, 1.0
  %v71 = vmax.f32 %v44, 1.0
  %v72 = vmax.f32 %v46, 1.0
  %v73 = vmax.f32 %v48, 1.0
  %v74 = vmax.f32 %v50, 1.0
  %v75 = vmax.f32 %v52, 1.0
  %v76 = vmax.f32 %v54, 1.0
  %v77 = vmax.f32 %v56, 1.0
  %v78 = vmax.f32 %v58, 1.0
  %v79 = vmax.f32 %v60, 1.0
  %v80 = vmax.f32 %v62, 1.0
  %v81 = vmax.f32 %v64, 1.0
  %v82 = vmax.f32 %v66, 1.0
  %v83 = vrsqrt.pop %v67
  %v84 = vrsqrt.pop %v68
  %v85 = vrsqrt.pop %v69
  %v86 = vrsqrt.pop %v70
  %v87 = vrsqrt.pop %v71
  %v88 = vrsqrt.pop %v72
  %v89 = vrsqrt.pop %v73
  %v90 = vrsqrt.pop %v74
  %v91 = vrsqrt.pop %v75
  %v92 = vrsqrt.pop %v76
  %v93 = vrsqrt.pop %v77
  %v94 = vrsqrt.pop %v78
  %v95 = vrsqrt.pop %v79
  %v96 = vrsqrt.pop %v80
  %v97 = vrsqrt.pop %v81
  %v98 = vrsqrt.pop %v82
  %v99 = vld [vmem:[%s1] sm:$0xff]
  %v100 = vld [vmem:[%s1 + $0x8] sm:$0xff]
  %v101 = vld [vmem:[%s1 + $0x10] sm:$0xff]
  %v102 = vld [vmem:[%s1 + $0x18] sm:$0xff]
  %v103 = vld [vmem:[%s1 + $0x20] sm:$0xff]
  %v104 = vld [vmem:[%s1 + $0x28] sm:$0xff]
  %v105 = vld [vmem:[%s1 + $0x30] sm:$0xff]
  %v106 = vld [vmem:[%s1 + $0x38] sm:$0xff]
  %v107 = vld [vmem:[%s1 + $0x40] sm:$0xff]
  %v108 = vld [vmem:[%s1 + $0x48] sm:$0xff]
  %v109 = vld [vmem:[%s1 + $0x50] sm:$0xff]
  %v110 = vld [vmem:[%s1 + $0x58] sm:$0xff]
  %v111 = vld [vmem:[%s1 + $0x60] sm:$0xff]
  %v112 = vld [vmem:[%s1 + $0x68] sm:$0xff]
  %v113 = vld [vmem:[%s1 + $0x70] sm:$0xff]
  %v114 = vld [vmem:[%s1 + $0x78] sm:$0xff]
  %v115 = vld [vmem:[%s2] sm:$0xff]
  %v116 = vld [vmem:[%s2 + $0x8] sm:$0xff]
  %v117 = vld [vmem:[%s2 + $0x10] sm:$0xff]
  %v118 = vld [vmem:[%s2 + $0x18] sm:$0xff]
  %v119 = vld [vmem:[%s2 + $0x20] sm:$0xff]
  %v120 = vld [vmem:[%s2 + $0x28] sm:$0xff]
  %v121 = vld [vmem:[%s2 + $0x30] sm:$0xff]
  %v122 = vld [vmem:[%s2 + $0x38] sm:$0xff]
  %v123 = vmul.f32 %v99, %v83
  %v124 = vmul.f32 %v100, %v84
  %v125 = vmul.f32 %v101, %v85
  %v126 = vmul.f32 %v102, %v86
  %v127 = vmul.f32 %v103, %v87
  %v128 = vmul.f32 %v104, %v88
  %v129 = vmul.f32 %v105, %v89
  %v130 = vmul.f32 %v106, %v90
  %v131 = vmul.f32 %v107, %v91
  %v132 = vmul.f32 %v108, %v92
  %v133 = vmul.f32 %v109, %v93
  %v134 = vmul.f32 %v110, %v94
  %v135 = vmul.f32 %v111, %v95
  %v136 = vmul.f32 %v112, %v96
  %v137 = vmul.f32 %v113, %v97
  %v138 = vmul.f32 %v114, %v98
  %vm139 = vcmask 523264
  %v141 = vsel %vm139, %v123, 0
  %v144 = vsel %vm139, %v124, 0
  %v147 = vsel %vm139, %v125, 0
  %v150 = vsel %vm139, %v126, 0
  %v153 = vsel %vm139, %v127, 0
  %v156 = vsel %vm139, %v128, 0
  %v159 = vsel %vm139, %v129, 0
  %v162 = vsel %vm139, %v130, 0
  %v165 = vsel %vm139, %v131, 0
  %v168 = vsel %vm139, %v132, 0
  %v171 = vsel %vm139, %v133, 0
  %v174 = vsel %vm139, %v134, 0
  %v177 = vsel %vm139, %v135, 0
  %v180 = vsel %vm139, %v136, 0
  %v183 = vsel %vm139, %v137, 0
  %v186 = vsel %vm139, %v138, 0
  %188 = vmatprep.subr.mxu0 0.0
  %189 = vmatpush1.msra.mxu0 %v115
  %190 = vmatprep.subr.mxu0 0.0
  %191 = vmatpush1.msra.mxu0 %v116
  %192 = vmatprep.subr.mxu0 0.0
  %193 = vmatpush1.msra.mxu0 %v117
  %194 = vmatprep.subr.mxu0 0.0
  %195 = vmatpush1.msra.mxu0 %v118
  %196 = vmatprep.subr.mxu0 0.0
  %197 = vmatpush1.msra.mxu0 %v119
  %198 = vmatprep.subr.mxu0 0.0
  %199 = vmatpush1.msra.mxu0 %v120
  %200 = vmatprep.subr.mxu0 0.0
  %201 = vmatpush1.msra.mxu0 %v121
  %202 = vmatprep.subr.mxu0 0.0
  %203 = vmatpush1.msra.mxu0 %v122
  %204 = vmatprep.subr.mxu0 0.0
  %205 = vmatpush1.msra.mxu0 0.0
  %206 = vmatprep.subr.mxu0 0.0
  %207 = vmatpush1.msra.mxu0 0.0
  %208 = vmatprep.subr.mxu0 0.0
  %209 = vmatpush1.msra.mxu0 0.0
  %210 = vmatprep.subr.mxu0 0.0
  %211 = vmatpush1.msra.mxu0 0.0
  %212 = vmatprep.subr.mxu0 0.0
  %213 = vmatpush1.msra.mxu0 0.0
  %214 = vmatprep.subr.mxu0 0.0
  %215 = vmatpush1.msra.mxu0 0.0
  %216 = vmatprep.subr.mxu0 0.0
  %217 = vmatpush1.msra.mxu0 0.0
  %218 = vmatprep.subr.mxu0 0.0
  %219 = vmatpush1.msra.mxu0 0.0
  %220 = vmatprep.subr.mxu0 0.0
  %221 = vmatpush1.msra.mxu0 0.0
  %222 = vmatprep.subr.mxu0 0.0
  %223 = vmatpush1.msra.mxu0 0.0
  %224 = vmatprep.subr.mxu0 0.0
  %225 = vmatpush1.msra.mxu0 0.0
  %226 = vmatprep.subr.mxu0 0.0
  %227 = vmatpush1.msra.mxu0 0.0
  %228 = vmatprep.subr.mxu0 0.0
  %229 = vmatpush1.msra.mxu0 0.0
  %230 = vmatprep.subr.mxu0 0.0
  %231 = vmatpush1.msra.mxu0 0.0
  %232 = vmatprep.subr.mxu0 0.0
  %233 = vmatpush1.msra.mxu0 0.0
  %234 = vmatprep.subr.mxu0 0.0
  %235 = vmatpush1.msra.mxu0 0.0
  %236 = vmatprep.subr.mxu0 0.0
  %237 = vmatpush1.msra.mxu0 0.0
  %238 = vmatprep.subr.mxu0 0.0
  %239 = vmatpush1.msra.mxu0 0.0
  %240 = vmatprep.subr.mxu0 0.0
  %241 = vmatpush1.msra.mxu0 0.0
  %242 = vmatprep.subr.mxu0 0.0
  %243 = vmatpush1.msra.mxu0 0.0
  %244 = vmatprep.subr.mxu0 0.0
  %245 = vmatpush1.msra.mxu0 0.0
  %246 = vmatprep.subr.mxu0 0.0
  %247 = vmatpush1.msra.mxu0 0.0
  %248 = vmatprep.subr.mxu0 0.0
  %249 = vmatpush1.msra.mxu0 0.0
  %250 = vmatprep.subr.mxu0 0.0
  %251 = vmatpush1.msra.mxu0 0.0
  %252 = vmatprep.mubr.f32.mxu0 0.0
  %253 = vmatmul.mubr.f32.gmra.mrb[0].mxu0 %v141
  %v254 = vpop.f32.mrb[0].mxu0
  %v255 = vadd.f32 0.0, %v254
  %v256 = vpop.f32.mrb[0].mxu0
  %257 = vmatprep.mubr.f32.mxu0 0.0
  %258 = vmatmul.mubr.f32.gmra.mrb[0].mxu0 %v144
  %v259 = vpop.f32.mrb[0].mxu0
  %v260 = vadd.f32 0.0, %v259
  %v261 = vpop.f32.mrb[0].mxu0
  %262 = vmatprep.mubr.f32.mxu0 0.0
  %263 = vmatmul.mubr.f32.gmra.mrb[0].mxu0 %v147
  %v264 = vpop.f32.mrb[0].mxu0
  %v265 = vadd.f32 0.0, %v264
  %v266 = vpop.f32.mrb[0].mxu0
  %267 = vmatprep.mubr.f32.mxu0 0.0
  %268 = vmatmul.mubr.f32.gmra.mrb[0].mxu0 %v150
  %v269 = vpop.f32.mrb[0].mxu0
  %v270 = vadd.f32 0.0, %v269
  %v271 = vpop.f32.mrb[0].mxu0
  %272 = vmatprep.mubr.f32.mxu0 0.0
  %273 = vmatmul.mubr.f32.gmra.mrb[0].mxu0 %v153
  %v274 = vpop.f32.mrb[0].mxu0
  %v275 = vadd.f32 0.0, %v274
  %v276 = vpop.f32.mrb[0].mxu0
  %277 = vmatprep.mubr.f32.mxu0 0.0
  %278 = vmatmul.mubr.f32.gmra.mrb[0].mxu0 %v156
  %v279 = vpop.f32.mrb[0].mxu0
  %v280 = vadd.f32 0.0, %v279
  %v281 = vpop.f32.mrb[0].mxu0
  %282 = vmatprep.mubr.f32.mxu0 0.0
  %283 = vmatmul.mubr.f32.gmra.mrb[0].mxu0 %v159
  %v284 = vpop.f32.mrb[0].mxu0
  %v285 = vadd.f32 0.0, %v284
  %v286 = vpop.f32.mrb[0].mxu0
  %287 = vmatprep.mubr.f32.mxu0 0.0
  %288 = vmatmul.mubr.f32.gmra.mrb[0].mxu0 %v162
  %v289 = vpop.f32.mrb[0].mxu0
  %v290 = vadd.f32 0.0, %v289
  %v291 = vpop.f32.mrb[0].mxu0
  %292 = vmatprep.mubr.f32.mxu0 0.0
  %293 = vmatmul.mubr.f32.gmra.mrb[0].mxu0 %v165
  %v294 = vpop.f32.mrb[0].mxu0
  %v295 = vadd.f32 0.0, %v294
  %v296 = vpop.f32.mrb[0].mxu0
  %297 = vmatprep.mubr.f32.mxu0 0.0
  %298 = vmatmul.mubr.f32.gmra.mrb[0].mxu0 %v168
  %v299 = vpop.f32.mrb[0].mxu0
  %v300 = vadd.f32 0.0, %v299
  %v301 = vpop.f32.mrb[0].mxu0
  %302 = vmatprep.mubr.f32.mxu0 0.0
  %303 = vmatmul.mubr.f32.gmra.mrb[0].mxu0 %v171
  %v304 = vpop.f32.mrb[0].mxu0
  %v305 = vadd.f32 0.0, %v304
  %v306 = vpop.f32.mrb[0].mxu0
  %307 = vmatprep.mubr.f32.mxu0 0.0
  %308 = vmatmul.mubr.f32.gmra.mrb[0].mxu0 %v174
  %v309 = vpop.f32.mrb[0].mxu0
  %v310 = vadd.f32 0.0, %v309
  %v311 = vpop.f32.mrb[0].mxu0
  %312 = vmatprep.mubr.f32.mxu0 0.0
  %313 = vmatmul.mubr.f32.gmra.mrb[0].mxu0 %v177
  %v314 = vpop.f32.mrb[0].mxu0
  %v315 = vadd.f32 0.0, %v314
  %v316 = vpop.f32.mrb[0].mxu0
  %317 = vmatprep.mubr.f32.mxu0 0.0
  %318 = vmatmul.mubr.f32.gmra.mrb[0].mxu0 %v180
  %v319 = vpop.f32.mrb[0].mxu0
  %v320 = vadd.f32 0.0, %v319
  %v321 = vpop.f32.mrb[0].mxu0
  %322 = vmatprep.mubr.f32.mxu0 0.0
  %323 = vmatmul.mubr.f32.gmra.mrb[0].mxu0 %v183
  %v324 = vpop.f32.mrb[0].mxu0
  %v325 = vadd.f32 0.0, %v324
  %v326 = vpop.f32.mrb[0].mxu0
  %327 = vmatprep.mubr.f32.mxu0 0.0
  %328 = vmatmul.mubr.f32.gmra.mrb[0].mxu0 %v186
  %v329 = vpop.f32.mrb[0].mxu0
  %v330 = vadd.f32 0.0, %v329
  %v331 = vpop.f32.mrb[0].mxu0
  %332 = vdwg.mxu0
  %333 = vmatprep.subr.mxu0 0.0
  %334 = vmatpush1.msra.mxu0 %v255
  %335 = vmatprep.subr.mxu0 0.0
  %336 = vmatpush1.msra.mxu0 %v260
  %337 = vmatprep.subr.mxu0 0.0
  %338 = vmatpush1.msra.mxu0 %v265
  %339 = vmatprep.subr.mxu0 0.0
  %340 = vmatpush1.msra.mxu0 %v270
  %341 = vmatprep.subr.mxu0 0.0
  %342 = vmatpush1.msra.mxu0 %v275
  %343 = vmatprep.subr.mxu0 0.0
  %344 = vmatpush1.msra.mxu0 %v280
  %345 = vmatprep.subr.mxu0 0.0
  %346 = vmatpush1.msra.mxu0 %v285
  %347 = vmatprep.subr.mxu0 0.0
  %348 = vmatpush1.msra.mxu0 %v290
  %349 = vmatprep.subr.mxu0 0.0
  %350 = vmatpush1.msra.mxu0 %v295
  %351 = vmatprep.subr.mxu0 0.0
  %352 = vmatpush1.msra.mxu0 %v300
  %353 = vmatprep.subr.mxu0 0.0
  %354 = vmatpush1.msra.mxu0 %v305
  %355 = vmatprep.subr.mxu0 0.0
  %356 = vmatpush1.msra.mxu0 %v310
  %357 = vmatprep.subr.mxu0 0.0
  %358 = vmatpush1.msra.mxu0 %v315
  %359 = vmatprep.subr.mxu0 0.0
  %360 = vmatpush1.msra.mxu0 %v320
  %361 = vmatprep.subr.mxu0 0.0
  %362 = vmatpush1.msra.mxu0 %v325
  %363 = vmatprep.subr.mxu0 0.0
  %364 = vmatpush1.msra.mxu0 %v330
  %365 = vmatprep.subr.mxu0 0.0
  %366 = vmatpush1.msra.mxu0 0.0
  %367 = vmatprep.subr.mxu0 0.0
  %368 = vmatpush1.msra.mxu0 0.0
  %369 = vmatprep.subr.mxu0 0.0
  %370 = vmatpush1.msra.mxu0 0.0
  %371 = vmatprep.subr.mxu0 0.0
  %372 = vmatpush1.msra.mxu0 0.0
  %373 = vmatprep.subr.mxu0 0.0
  %374 = vmatpush1.msra.mxu0 0.0
  %375 = vmatprep.subr.mxu0 0.0
  %376 = vmatpush1.msra.mxu0 0.0
  %377 = vmatprep.subr.mxu0 0.0
  %378 = vmatpush1.msra.mxu0 0.0
  %379 = vmatprep.subr.mxu0 0.0
  %380 = vmatpush1.msra.mxu0 0.0
  %381 = vmatprep.subr.mxu0 0.0
  %382 = vmatpush1.msra.mxu0 0.0
  %383 = vmatprep.subr.mxu0 0.0
  %384 = vmatpush1.msra.mxu0 0.0
  %385 = vmatprep.subr.mxu0 0.0
  %386 = vmatpush1.msra.mxu0 0.0
  %387 = vmatprep.subr.mxu0 0.0
  %388 = vmatpush1.msra.mxu0 0.0
  %389 = vmatprep.subr.mxu0 0.0
  %390 = vmatpush1.msra.mxu0 0.0
  %391 = vmatprep.subr.mxu0 0.0
  %392 = vmatpush1.msra.mxu0 0.0
  %393 = vmatprep.subr.mxu0 0.0
  %394 = vmatpush1.msra.mxu0 0.0
  %395 = vmatprep.subr.mxu0 0.0
  %396 = vmatpush1.msra.mxu0 0.0
  %397 = vmatprep.mubr.f32.mxu0 0.0
  %398 = vmatmul.mubr.f32.gmra.mrb[0].mxu0 %v19
  %v399 = vpop.f32.mrb[0].mxu0
  %v400 = vadd.f32 0.0, %v399
  %v401 = vpop.f32.mrb[0].mxu0
  %402 = vmatprep.mubr.f32.mxu0 0.0
  %403 = vmatmul.mubr.f32.gmra.mrb[0].mxu0 %v20
  %v404 = vpop.f32.mrb[0].mxu0
  %v405 = vadd.f32 0.0, %v404
  %v406 = vpop.f32.mrb[0].mxu0
  %407 = vmatprep.mubr.f32.mxu0 0.0
  %408 = vmatmul.mubr.f32.gmra.mrb[0].mxu0 %v21
  %v409 = vpop.f32.mrb[0].mxu0
  %v410 = vadd.f32 0.0, %v409
  %v411 = vpop.f32.mrb[0].mxu0
  %412 = vmatprep.mubr.f32.mxu0 0.0
  %413 = vmatmul.mubr.f32.gmra.mrb[0].mxu0 %v22
  %v414 = vpop.f32.mrb[0].mxu0
  %v415 = vadd.f32 0.0, %v414
  %v416 = vpop.f32.mrb[0].mxu0
  %417 = vmatprep.mubr.f32.mxu0 0.0
  %418 = vmatmul.mubr.f32.gmra.mrb[0].mxu0 %v23
  %v419 = vpop.f32.mrb[0].mxu0
  %v420 = vadd.f32 0.0, %v419
  %v421 = vpop.f32.mrb[0].mxu0
  %422 = vmatprep.mubr.f32.mxu0 0.0
  %423 = vmatmul.mubr.f32.gmra.mrb[0].mxu0 %v24
  %v424 = vpop.f32.mrb[0].mxu0
  %v425 = vadd.f32 0.0, %v424
  %v426 = vpop.f32.mrb[0].mxu0
  %427 = vmatprep.mubr.f32.mxu0 0.0
  %428 = vmatmul.mubr.f32.gmra.mrb[0].mxu0 %v25
  %v429 = vpop.f32.mrb[0].mxu0
  %v430 = vadd.f32 0.0, %v429
  %v431 = vpop.f32.mrb[0].mxu0
  %432 = vmatprep.mubr.f32.mxu0 0.0
  %433 = vmatmul.mubr.f32.gmra.mrb[0].mxu0 %v26
  %v434 = vpop.f32.mrb[0].mxu0
  %v435 = vadd.f32 0.0, %v434
  %v436 = vpop.f32.mrb[0].mxu0
  %437 = vmatprep.mubr.f32.mxu0 0.0
  %438 = vmatmul.mubr.f32.gmra.mrb[0].mxu0 %v27
  %v439 = vpop.f32.mrb[0].mxu0
  %v440 = vadd.f32 0.0, %v439
  %v441 = vpop.f32.mrb[0].mxu0
  %442 = vmatprep.mubr.f32.mxu0 0.0
  %443 = vmatmul.mubr.f32.gmra.mrb[0].mxu0 %v28
  %v444 = vpop.f32.mrb[0].mxu0
  %v445 = vadd.f32 0.0, %v444
  %v446 = vpop.f32.mrb[0].mxu0
  %447 = vmatprep.mubr.f32.mxu0 0.0
  %448 = vmatmul.mubr.f32.gmra.mrb[0].mxu0 %v29
  %v449 = vpop.f32.mrb[0].mxu0
  %v450 = vadd.f32 0.0, %v449
  %v451 = vpop.f32.mrb[0].mxu0
  %452 = vmatprep.mubr.f32.mxu0 0.0
  %453 = vmatmul.mubr.f32.gmra.mrb[0].mxu0 %v30
  %v454 = vpop.f32.mrb[0].mxu0
  %v455 = vadd.f32 0.0, %v454
  %v456 = vpop.f32.mrb[0].mxu0
  %457 = vmatprep.mubr.f32.mxu0 0.0
  %458 = vmatmul.mubr.f32.gmra.mrb[0].mxu0 %v31
  %v459 = vpop.f32.mrb[0].mxu0
  %v460 = vadd.f32 0.0, %v459
  %v461 = vpop.f32.mrb[0].mxu0
  %462 = vmatprep.mubr.f32.mxu0 0.0
  %463 = vmatmul.mubr.f32.gmra.mrb[0].mxu0 %v32
  %v464 = vpop.f32.mrb[0].mxu0
  %v465 = vadd.f32 0.0, %v464
  %v466 = vpop.f32.mrb[0].mxu0
  %467 = vmatprep.mubr.f32.mxu0 0.0
  %468 = vmatmul.mubr.f32.gmra.mrb[0].mxu0 %v33
  %v469 = vpop.f32.mrb[0].mxu0
  %v470 = vadd.f32 0.0, %v469
  %v471 = vpop.f32.mrb[0].mxu0
  %472 = vmatprep.mubr.f32.mxu0 0.0
  %473 = vmatmul.mubr.f32.gmra.mrb[0].mxu0 %v34
  %v474 = vpop.f32.mrb[0].mxu0
  %v475 = vadd.f32 0.0, %v474
  %v476 = vpop.f32.mrb[0].mxu0
  %477 = vdwg.mxu0
  %v478 = vmul.f32 %v400, %v83
  %v479 = vmul.f32 %v405, %v84
  %v480 = vmul.f32 %v410, %v85
  %v481 = vmul.f32 %v415, %v86
  %v482 = vmul.f32 %v420, %v87
  %v483 = vmul.f32 %v425, %v88
  %v484 = vmul.f32 %v430, %v89
  %v485 = vmul.f32 %v435, %v90
  %v486 = vmul.f32 %v440, %v91
  %v487 = vmul.f32 %v445, %v92
  %v488 = vmul.f32 %v450, %v93
  %v489 = vmul.f32 %v455, %v94
  %v490 = vmul.f32 %v460, %v95
  %v491 = vmul.f32 %v465, %v96
  %v492 = vmul.f32 %v470, %v97
  %v493 = vmul.f32 %v475, %v98
  %v494 = vmax.f32 %v478, 0.0
  %v495 = vmax.f32 %v479, 0.0
  %v496 = vmax.f32 %v480, 0.0
  %v497 = vmax.f32 %v481, 0.0
  %v498 = vmax.f32 %v482, 0.0
  %v499 = vmax.f32 %v483, 0.0
  %v500 = vmax.f32 %v484, 0.0
  %v501 = vmax.f32 %v485, 0.0
  %v502 = vmax.f32 %v486, 0.0
  %v503 = vmax.f32 %v487, 0.0
  %v504 = vmax.f32 %v488, 0.0
  %v505 = vmax.f32 %v489, 0.0
  %v506 = vmax.f32 %v490, 0.0
  %v507 = vmax.f32 %v491, 0.0
  %v508 = vmax.f32 %v492, 0.0
  %v509 = vmax.f32 %v493, 0.0
  %v510 = vld [vmem:[%s3] sm:$0xff]
  %v511 = vld [vmem:[%s3 + $0x8] sm:$0xff]
  %v512 = vld [vmem:[%s3 + $0x10] sm:$0xff]
  %v513 = vld [vmem:[%s3 + $0x18] sm:$0xff]
  %v514 = vmul.f32 %v494, %v83
  %v515 = vmul.f32 %v495, %v84
  %v516 = vmul.f32 %v496, %v85
  %v517 = vmul.f32 %v497, %v86
  %v518 = vmul.f32 %v498, %v87
  %v519 = vmul.f32 %v499, %v88
  %v520 = vmul.f32 %v500, %v89
  %v521 = vmul.f32 %v501, %v90
  %v522 = vmul.f32 %v502, %v91
  %v523 = vmul.f32 %v503, %v92
  %v524 = vmul.f32 %v504, %v93
  %v525 = vmul.f32 %v505, %v94
  %v526 = vmul.f32 %v506, %v95
  %v527 = vmul.f32 %v507, %v96
  %v528 = vmul.f32 %v508, %v97
  %v529 = vmul.f32 %v509, %v98
  %vm530 = vcmask 261120
  %v532 = vsel %vm530, %v514, 0
  %v535 = vsel %vm530, %v515, 0
  %v538 = vsel %vm530, %v516, 0
  %v541 = vsel %vm530, %v517, 0
  %v544 = vsel %vm530, %v518, 0
  %v547 = vsel %vm530, %v519, 0
  %v550 = vsel %vm530, %v520, 0
  %v553 = vsel %vm530, %v521, 0
  %v556 = vsel %vm530, %v522, 0
  %v559 = vsel %vm530, %v523, 0
  %v562 = vsel %vm530, %v524, 0
  %v565 = vsel %vm530, %v525, 0
  %v568 = vsel %vm530, %v526, 0
  %v571 = vsel %vm530, %v527, 0
  %v574 = vsel %vm530, %v528, 0
  %v577 = vsel %vm530, %v529, 0
  %579 = vmatprep.subr.mxu0 0.0
  %580 = vmatpush1.msra.mxu0 %v510
  %581 = vmatprep.subr.mxu0 0.0
  %582 = vmatpush1.msra.mxu0 %v511
  %583 = vmatprep.subr.mxu0 0.0
  %584 = vmatpush1.msra.mxu0 %v512
  %585 = vmatprep.subr.mxu0 0.0
  %586 = vmatpush1.msra.mxu0 %v513
  %587 = vmatprep.subr.mxu0 0.0
  %588 = vmatpush1.msra.mxu0 0.0
  %589 = vmatprep.subr.mxu0 0.0
  %590 = vmatpush1.msra.mxu0 0.0
  %591 = vmatprep.subr.mxu0 0.0
  %592 = vmatpush1.msra.mxu0 0.0
  %593 = vmatprep.subr.mxu0 0.0
  %594 = vmatpush1.msra.mxu0 0.0
  %595 = vmatprep.subr.mxu0 0.0
  %596 = vmatpush1.msra.mxu0 0.0
  %597 = vmatprep.subr.mxu0 0.0
  %598 = vmatpush1.msra.mxu0 0.0
  %599 = vmatprep.subr.mxu0 0.0
  %600 = vmatpush1.msra.mxu0 0.0
  %601 = vmatprep.subr.mxu0 0.0
  %602 = vmatpush1.msra.mxu0 0.0
  %603 = vmatprep.subr.mxu0 0.0
  %604 = vmatpush1.msra.mxu0 0.0
  %605 = vmatprep.subr.mxu0 0.0
  %606 = vmatpush1.msra.mxu0 0.0
  %607 = vmatprep.subr.mxu0 0.0
  %608 = vmatpush1.msra.mxu0 0.0
  %609 = vmatprep.subr.mxu0 0.0
  %610 = vmatpush1.msra.mxu0 0.0
  %611 = vmatprep.subr.mxu0 0.0
  %612 = vmatpush1.msra.mxu0 0.0
  %613 = vmatprep.subr.mxu0 0.0
  %614 = vmatpush1.msra.mxu0 0.0
  %615 = vmatprep.subr.mxu0 0.0
  %616 = vmatpush1.msra.mxu0 0.0
  %617 = vmatprep.subr.mxu0 0.0
  %618 = vmatpush1.msra.mxu0 0.0
  %619 = vmatprep.subr.mxu0 0.0
  %620 = vmatpush1.msra.mxu0 0.0
  %621 = vmatprep.subr.mxu0 0.0
  %622 = vmatpush1.msra.mxu0 0.0
  %623 = vmatprep.subr.mxu0 0.0
  %624 = vmatpush1.msra.mxu0 0.0
  %625 = vmatprep.subr.mxu0 0.0
  %626 = vmatpush1.msra.mxu0 0.0
  %627 = vmatprep.subr.mxu0 0.0
  %628 = vmatpush1.msra.mxu0 0.0
  %629 = vmatprep.subr.mxu0 0.0
  %630 = vmatpush1.msra.mxu0 0.0
  %631 = vmatprep.subr.mxu0 0.0
  %632 = vmatpush1.msra.mxu0 0.0
  %633 = vmatprep.subr.mxu0 0.0
  %634 = vmatpush1.msra.mxu0 0.0
  %635 = vmatprep.subr.mxu0 0.0
  %636 = vmatpush1.msra.mxu0 0.0
  %637 = vmatprep.subr.mxu0 0.0
  %638 = vmatpush1.msra.mxu0 0.0
  %639 = vmatprep.subr.mxu0 0.0
  %640 = vmatpush1.msra.mxu0 0.0
  %641 = vmatprep.subr.mxu0 0.0
  %642 = vmatpush1.msra.mxu0 0.0
  %643 = vmatprep.mubr.f32.mxu0 0.0
  %644 = vmatmul.mubr.f32.gmra.mrb[0].mxu0 %v532
  %v645 = vpop.f32.mrb[0].mxu0
  %v646 = vadd.f32 0.0, %v645
  %v647 = vpop.f32.mrb[0].mxu0
  %648 = vmatprep.mubr.f32.mxu0 0.0
  %649 = vmatmul.mubr.f32.gmra.mrb[0].mxu0 %v535
  %v650 = vpop.f32.mrb[0].mxu0
  %v651 = vadd.f32 0.0, %v650
  %v652 = vpop.f32.mrb[0].mxu0
  %653 = vmatprep.mubr.f32.mxu0 0.0
  %654 = vmatmul.mubr.f32.gmra.mrb[0].mxu0 %v538
  %v655 = vpop.f32.mrb[0].mxu0
  %v656 = vadd.f32 0.0, %v655
  %v657 = vpop.f32.mrb[0].mxu0
  %658 = vmatprep.mubr.f32.mxu0 0.0
  %659 = vmatmul.mubr.f32.gmra.mrb[0].mxu0 %v541
  %v660 = vpop.f32.mrb[0].mxu0
  %v661 = vadd.f32 0.0, %v660
  %v662 = vpop.f32.mrb[0].mxu0
  %663 = vmatprep.mubr.f32.mxu0 0.0
  %664 = vmatmul.mubr.f32.gmra.mrb[0].mxu0 %v544
  %v665 = vpop.f32.mrb[0].mxu0
  %v666 = vadd.f32 0.0, %v665
  %v667 = vpop.f32.mrb[0].mxu0
  %668 = vmatprep.mubr.f32.mxu0 0.0
  %669 = vmatmul.mubr.f32.gmra.mrb[0].mxu0 %v547
  %v670 = vpop.f32.mrb[0].mxu0
  %v671 = vadd.f32 0.0, %v670
  %v672 = vpop.f32.mrb[0].mxu0
  %673 = vmatprep.mubr.f32.mxu0 0.0
  %674 = vmatmul.mubr.f32.gmra.mrb[0].mxu0 %v550
  %v675 = vpop.f32.mrb[0].mxu0
  %v676 = vadd.f32 0.0, %v675
  %v677 = vpop.f32.mrb[0].mxu0
  %678 = vmatprep.mubr.f32.mxu0 0.0
  %679 = vmatmul.mubr.f32.gmra.mrb[0].mxu0 %v553
  %v680 = vpop.f32.mrb[0].mxu0
  %v681 = vadd.f32 0.0, %v680
  %v682 = vpop.f32.mrb[0].mxu0
  %683 = vmatprep.mubr.f32.mxu0 0.0
  %684 = vmatmul.mubr.f32.gmra.mrb[0].mxu0 %v556
  %v685 = vpop.f32.mrb[0].mxu0
  %v686 = vadd.f32 0.0, %v685
  %v687 = vpop.f32.mrb[0].mxu0
  %688 = vmatprep.mubr.f32.mxu0 0.0
  %689 = vmatmul.mubr.f32.gmra.mrb[0].mxu0 %v559
  %v690 = vpop.f32.mrb[0].mxu0
  %v691 = vadd.f32 0.0, %v690
  %v692 = vpop.f32.mrb[0].mxu0
  %693 = vmatprep.mubr.f32.mxu0 0.0
  %694 = vmatmul.mubr.f32.gmra.mrb[0].mxu0 %v562
  %v695 = vpop.f32.mrb[0].mxu0
  %v696 = vadd.f32 0.0, %v695
  %v697 = vpop.f32.mrb[0].mxu0
  %698 = vmatprep.mubr.f32.mxu0 0.0
  %699 = vmatmul.mubr.f32.gmra.mrb[0].mxu0 %v565
  %v700 = vpop.f32.mrb[0].mxu0
  %v701 = vadd.f32 0.0, %v700
  %v702 = vpop.f32.mrb[0].mxu0
  %703 = vmatprep.mubr.f32.mxu0 0.0
  %704 = vmatmul.mubr.f32.gmra.mrb[0].mxu0 %v568
  %v705 = vpop.f32.mrb[0].mxu0
  %v706 = vadd.f32 0.0, %v705
  %v707 = vpop.f32.mrb[0].mxu0
  %708 = vmatprep.mubr.f32.mxu0 0.0
  %709 = vmatmul.mubr.f32.gmra.mrb[0].mxu0 %v571
  %v710 = vpop.f32.mrb[0].mxu0
  %v711 = vadd.f32 0.0, %v710
  %v712 = vpop.f32.mrb[0].mxu0
  %713 = vmatprep.mubr.f32.mxu0 0.0
  %714 = vmatmul.mubr.f32.gmra.mrb[0].mxu0 %v574
  %v715 = vpop.f32.mrb[0].mxu0
  %v716 = vadd.f32 0.0, %v715
  %v717 = vpop.f32.mrb[0].mxu0
  %718 = vmatprep.mubr.f32.mxu0 0.0
  %719 = vmatmul.mubr.f32.gmra.mrb[0].mxu0 %v577
  %v720 = vpop.f32.mrb[0].mxu0
  %v721 = vadd.f32 0.0, %v720
  %v722 = vpop.f32.mrb[0].mxu0
  %723 = vdwg.mxu0
  %724 = vmatprep.subr.mxu0 0.0
  %725 = vmatpush1.msra.mxu0 %v646
  %726 = vmatprep.subr.mxu0 0.0
  %727 = vmatpush1.msra.mxu0 %v651
  %728 = vmatprep.subr.mxu0 0.0
  %729 = vmatpush1.msra.mxu0 %v656
  %730 = vmatprep.subr.mxu0 0.0
  %731 = vmatpush1.msra.mxu0 %v661
  %732 = vmatprep.subr.mxu0 0.0
  %733 = vmatpush1.msra.mxu0 %v666
  %734 = vmatprep.subr.mxu0 0.0
  %735 = vmatpush1.msra.mxu0 %v671
  %736 = vmatprep.subr.mxu0 0.0
  %737 = vmatpush1.msra.mxu0 %v676
  %738 = vmatprep.subr.mxu0 0.0
  %739 = vmatpush1.msra.mxu0 %v681
  %740 = vmatprep.subr.mxu0 0.0
  %741 = vmatpush1.msra.mxu0 %v686
  %742 = vmatprep.subr.mxu0 0.0
  %743 = vmatpush1.msra.mxu0 %v691
  %744 = vmatprep.subr.mxu0 0.0
  %745 = vmatpush1.msra.mxu0 %v696
  %746 = vmatprep.subr.mxu0 0.0
  %747 = vmatpush1.msra.mxu0 %v701
  %748 = vmatprep.subr.mxu0 0.0
  %749 = vmatpush1.msra.mxu0 %v706
  %750 = vmatprep.subr.mxu0 0.0
  %751 = vmatpush1.msra.mxu0 %v711
  %752 = vmatprep.subr.mxu0 0.0
  %753 = vmatpush1.msra.mxu0 %v716
  %754 = vmatprep.subr.mxu0 0.0
  %755 = vmatpush1.msra.mxu0 %v721
  %756 = vmatprep.subr.mxu0 0.0
  %757 = vmatpush1.msra.mxu0 0.0
  %758 = vmatprep.subr.mxu0 0.0
  %759 = vmatpush1.msra.mxu0 0.0
  %760 = vmatprep.subr.mxu0 0.0
  %761 = vmatpush1.msra.mxu0 0.0
  %762 = vmatprep.subr.mxu0 0.0
  %763 = vmatpush1.msra.mxu0 0.0
  %764 = vmatprep.subr.mxu0 0.0
  %765 = vmatpush1.msra.mxu0 0.0
  %766 = vmatprep.subr.mxu0 0.0
  %767 = vmatpush1.msra.mxu0 0.0
  %768 = vmatprep.subr.mxu0 0.0
  %769 = vmatpush1.msra.mxu0 0.0
  %770 = vmatprep.subr.mxu0 0.0
  %771 = vmatpush1.msra.mxu0 0.0
  %772 = vmatprep.subr.mxu0 0.0
  %773 = vmatpush1.msra.mxu0 0.0
  %774 = vmatprep.subr.mxu0 0.0
  %775 = vmatpush1.msra.mxu0 0.0
  %776 = vmatprep.subr.mxu0 0.0
  %777 = vmatpush1.msra.mxu0 0.0
  %778 = vmatprep.subr.mxu0 0.0
  %779 = vmatpush1.msra.mxu0 0.0
  %780 = vmatprep.subr.mxu0 0.0
  %781 = vmatpush1.msra.mxu0 0.0
  %782 = vmatprep.subr.mxu0 0.0
  %783 = vmatpush1.msra.mxu0 0.0
  %784 = vmatprep.subr.mxu0 0.0
  %785 = vmatpush1.msra.mxu0 0.0
  %786 = vmatprep.subr.mxu0 0.0
  %787 = vmatpush1.msra.mxu0 0.0
  %788 = vmatprep.mubr.f32.mxu0 0.0
  %789 = vmatmul.mubr.f32.gmra.mrb[0].mxu0 %v19
  %v790 = vpop.f32.mrb[0].mxu0
  %v791 = vadd.f32 0.0, %v790
  %v792 = vpop.f32.mrb[0].mxu0
  %793 = vmatprep.mubr.f32.mxu0 0.0
  %794 = vmatmul.mubr.f32.gmra.mrb[0].mxu0 %v20
  %v795 = vpop.f32.mrb[0].mxu0
  %v796 = vadd.f32 0.0, %v795
  %v797 = vpop.f32.mrb[0].mxu0
  %798 = vmatprep.mubr.f32.mxu0 0.0
  %799 = vmatmul.mubr.f32.gmra.mrb[0].mxu0 %v21
  %v800 = vpop.f32.mrb[0].mxu0
  %v801 = vadd.f32 0.0, %v800
  %v802 = vpop.f32.mrb[0].mxu0
  %803 = vmatprep.mubr.f32.mxu0 0.0
  %804 = vmatmul.mubr.f32.gmra.mrb[0].mxu0 %v22
  %v805 = vpop.f32.mrb[0].mxu0
  %v806 = vadd.f32 0.0, %v805
  %v807 = vpop.f32.mrb[0].mxu0
  %808 = vmatprep.mubr.f32.mxu0 0.0
  %809 = vmatmul.mubr.f32.gmra.mrb[0].mxu0 %v23
  %v810 = vpop.f32.mrb[0].mxu0
  %v811 = vadd.f32 0.0, %v810
  %v812 = vpop.f32.mrb[0].mxu0
  %813 = vmatprep.mubr.f32.mxu0 0.0
  %814 = vmatmul.mubr.f32.gmra.mrb[0].mxu0 %v24
  %v815 = vpop.f32.mrb[0].mxu0
  %v816 = vadd.f32 0.0, %v815
  %v817 = vpop.f32.mrb[0].mxu0
  %818 = vmatprep.mubr.f32.mxu0 0.0
  %819 = vmatmul.mubr.f32.gmra.mrb[0].mxu0 %v25
  %v820 = vpop.f32.mrb[0].mxu0
  %v821 = vadd.f32 0.0, %v820
  %v822 = vpop.f32.mrb[0].mxu0
  %823 = vmatprep.mubr.f32.mxu0 0.0
  %824 = vmatmul.mubr.f32.gmra.mrb[0].mxu0 %v26
  %v825 = vpop.f32.mrb[0].mxu0
  %v826 = vadd.f32 0.0, %v825
  %v827 = vpop.f32.mrb[0].mxu0
  %828 = vmatprep.mubr.f32.mxu0 0.0
  %829 = vmatmul.mubr.f32.gmra.mrb[0].mxu0 %v27
  %v830 = vpop.f32.mrb[0].mxu0
  %v831 = vadd.f32 0.0, %v830
  %v832 = vpop.f32.mrb[0].mxu0
  %833 = vmatprep.mubr.f32.mxu0 0.0
  %834 = vmatmul.mubr.f32.gmra.mrb[0].mxu0 %v28
  %v835 = vpop.f32.mrb[0].mxu0
  %v836 = vadd.f32 0.0, %v835
  %v837 = vpop.f32.mrb[0].mxu0
  %838 = vmatprep.mubr.f32.mxu0 0.0
  %839 = vmatmul.mubr.f32.gmra.mrb[0].mxu0 %v29
  %v840 = vpop.f32.mrb[0].mxu0
  %v841 = vadd.f32 0.0, %v840
  %v842 = vpop.f32.mrb[0].mxu0
  %843 = vmatprep.mubr.f32.mxu0 0.0
  %844 = vmatmul.mubr.f32.gmra.mrb[0].mxu0 %v30
  %v845 = vpop.f32.mrb[0].mxu0
  %v846 = vadd.f32 0.0, %v845
  %v847 = vpop.f32.mrb[0].mxu0
  %848 = vmatprep.mubr.f32.mxu0 0.0
  %849 = vmatmul.mubr.f32.gmra.mrb[0].mxu0 %v31
  %v850 = vpop.f32.mrb[0].mxu0
  %v851 = vadd.f32 0.0, %v850
  %v852 = vpop.f32.mrb[0].mxu0
  %853 = vmatprep.mubr.f32.mxu0 0.0
  %854 = vmatmul.mubr.f32.gmra.mrb[0].mxu0 %v32
  %v855 = vpop.f32.mrb[0].mxu0
  %v856 = vadd.f32 0.0, %v855
  %v857 = vpop.f32.mrb[0].mxu0
  %858 = vmatprep.mubr.f32.mxu0 0.0
  %859 = vmatmul.mubr.f32.gmra.mrb[0].mxu0 %v33
  %v860 = vpop.f32.mrb[0].mxu0
  %v861 = vadd.f32 0.0, %v860
  %v862 = vpop.f32.mrb[0].mxu0
  %863 = vmatprep.mubr.f32.mxu0 0.0
  %864 = vmatmul.mubr.f32.gmra.mrb[0].mxu0 %v34
  %v865 = vpop.f32.mrb[0].mxu0
  %v866 = vadd.f32 0.0, %v865
  %v867 = vpop.f32.mrb[0].mxu0
  %868 = vdwg.mxu0
  %v869 = vmul.f32 %v791, %v83
  %v870 = vmul.f32 %v796, %v84
  %v871 = vmul.f32 %v801, %v85
  %v872 = vmul.f32 %v806, %v86
  %v873 = vmul.f32 %v811, %v87
  %v874 = vmul.f32 %v816, %v88
  %v875 = vmul.f32 %v821, %v89
  %v876 = vmul.f32 %v826, %v90
  %v877 = vmul.f32 %v831, %v91
  %v878 = vmul.f32 %v836, %v92
  %v879 = vmul.f32 %v841, %v93
  %v880 = vmul.f32 %v846, %v94
  %v881 = vmul.f32 %v851, %v95
  %v882 = vmul.f32 %v856, %v96
  %v883 = vmul.f32 %v861, %v97
  %v884 = vmul.f32 %v866, %v98
  %v885 = vmul.f32 %v869, 0.5
  %v886 = vmul.f32 %v870, 0.5
  %v887 = vmul.f32 %v871, 0.5
  %v888 = vmul.f32 %v872, 0.5
  %v889 = vmul.f32 %v873, 0.5
  %v890 = vmul.f32 %v874, 0.5
  %v891 = vmul.f32 %v875, 0.5
  %v892 = vmul.f32 %v876, 0.5
  %v893 = vmul.f32 %v877, 0.5
  %v894 = vmul.f32 %v878, 0.5
  %v895 = vmul.f32 %v879, 0.5
  %v896 = vmul.f32 %v880, 0.5
  %v897 = vmul.f32 %v881, 0.5
  %v898 = vmul.f32 %v882, 0.5
  %v899 = vmul.f32 %v883, 0.5
  %v900 = vmul.f32 %v884, 0.5
  %vm901 = vcmask 130048
  %902 = vst.msk [vmem:[%s4] sm:$0xff] %vm901, %v885
  %903 = vst.msk [vmem:[%s4 + $0x8] sm:$0xff] %vm901, %v886
  %904 = vst.msk [vmem:[%s4 + $0x10] sm:$0xff] %vm901, %v887
  %905 = vst.msk [vmem:[%s4 + $0x18] sm:$0xff] %vm901, %v888
  %906 = vst.msk [vmem:[%s4 + $0x20] sm:$0xff] %vm901, %v889
  %907 = vst.msk [vmem:[%s4 + $0x28] sm:$0xff] %vm901, %v890
  %908 = vst.msk [vmem:[%s4 + $0x30] sm:$0xff] %vm901, %v891
  %909 = vst.msk [vmem:[%s4 + $0x38] sm:$0xff] %vm901, %v892
  %910 = vst.msk [vmem:[%s4 + $0x40] sm:$0xff] %vm901, %v893
  %911 = vst.msk [vmem:[%s4 + $0x48] sm:$0xff] %vm901, %v894
  %912 = vst.msk [vmem:[%s4 + $0x50] sm:$0xff] %vm901, %v895
  %913 = vst.msk [vmem:[%s4 + $0x58] sm:$0xff] %vm901, %v896
  %914 = vst.msk [vmem:[%s4 + $0x60] sm:$0xff] %vm901, %v897
  %915 = vst.msk [vmem:[%s4 + $0x68] sm:$0xff] %vm901, %v898
  %916 = vst.msk [vmem:[%s4 + $0x70] sm:$0xff] %vm901, %v899
  %917 = vst.msk [vmem:[%s4 + $0x78] sm:$0xff] %vm901, %v900
  %v918 = vmul.f32 %v869, 1.442695
  %v919 = vpow.pop %v918
  %v920 = vmul.f32 %v870, 1.442695
  %v921 = vpow.pop %v920
  %v922 = vmul.f32 %v871, 1.442695
  %v923 = vpow.pop %v922
  %v924 = vmul.f32 %v872, 1.442695
  %v925 = vpow.pop %v924
  %v926 = vmul.f32 %v873, 1.442695
  %v927 = vpow.pop %v926
  %v928 = vmul.f32 %v874, 1.442695
  %v929 = vpow.pop %v928
  %v930 = vmul.f32 %v875, 1.442695
  %v931 = vpow.pop %v930
  %v932 = vmul.f32 %v876, 1.442695
  %v933 = vpow.pop %v932
  %v934 = vmul.f32 %v877, 1.442695
  %v935 = vpow.pop %v934
  %v936 = vmul.f32 %v878, 1.442695
  %v937 = vpow.pop %v936
  %v938 = vmul.f32 %v879, 1.442695
  %v939 = vpow.pop %v938
  %v940 = vmul.f32 %v880, 1.442695
  %v941 = vpow.pop %v940
  %v942 = vmul.f32 %v881, 1.442695
  %v943 = vpow.pop %v942
  %v944 = vmul.f32 %v882, 1.442695
  %v945 = vpow.pop %v944
  %v946 = vmul.f32 %v883, 1.442695
  %v947 = vpow.pop %v946
  %v948 = vmul.f32 %v884, 1.442695
  %v949 = vpow.pop %v948
  %v950 = vmul.f32 %v919, 0.5
  %v951 = vmul.f32 %v921, 0.5
  %v952 = vmul.f32 %v923, 0.5
  %v953 = vmul.f32 %v925, 0.5
  %v954 = vmul.f32 %v927, 0.5
  %v955 = vmul.f32 %v929, 0.5
  %v956 = vmul.f32 %v931, 0.5
  %v957 = vmul.f32 %v933, 0.5
  %v958 = vmul.f32 %v935, 0.5
  %v959 = vmul.f32 %v937, 0.5
  %v960 = vmul.f32 %v939, 0.5
  %v961 = vmul.f32 %v941, 0.5
  %v962 = vmul.f32 %v943, 0.5
  %v963 = vmul.f32 %v945, 0.5
  %v964 = vmul.f32 %v947, 0.5
  %v965 = vmul.f32 %v949, 0.5
  %982 = vrot.lane.b32.xlu0 %v950, 112
  %v983 = vpop.permute.xlu0 %982
  %984 = vrot.lane.b32.xlu0 %v951, 112
  %v985 = vpop.permute.xlu0 %984
  %986 = vrot.lane.b32.xlu0 %v952, 112
  %v987 = vpop.permute.xlu0 %986
  %988 = vrot.lane.b32.xlu0 %v953, 112
  %v989 = vpop.permute.xlu0 %988
  %990 = vrot.lane.b32.xlu0 %v954, 112
  %v991 = vpop.permute.xlu0 %990
  %992 = vrot.lane.b32.xlu0 %v955, 112
  %v993 = vpop.permute.xlu0 %992
  %994 = vrot.lane.b32.xlu0 %v956, 112
  %v995 = vpop.permute.xlu0 %994
  %996 = vrot.lane.b32.xlu0 %v957, 112
  %v997 = vpop.permute.xlu0 %996
  %998 = vrot.lane.b32.xlu0 %v958, 112
  %v999 = vpop.permute.xlu0 %998
  %1000 = vrot.lane.b32.xlu0 %v959, 112
  %v1001 = vpop.permute.xlu0 %1000
  %1002 = vrot.lane.b32.xlu0 %v960, 112
  %v1003 = vpop.permute.xlu0 %1002
  %1004 = vrot.lane.b32.xlu0 %v961, 112
  %v1005 = vpop.permute.xlu0 %1004
  %1006 = vrot.lane.b32.xlu0 %v962, 112
  %v1007 = vpop.permute.xlu0 %1006
  %1008 = vrot.lane.b32.xlu0 %v963, 112
  %v1009 = vpop.permute.xlu0 %1008
  %1010 = vrot.lane.b32.xlu0 %v964, 112
  %v1011 = vpop.permute.xlu0 %1010
  %1012 = vrot.lane.b32.xlu0 %v965, 112
  %v1013 = vpop.permute.xlu0 %1012
  %1030 = vst.msk [vmem:[%s5] sm:$0xff] %vm901, %v983
  %1031 = vst.msk [vmem:[%s5 + $0x8] sm:$0xff] %vm901, %v985
  %1032 = vst.msk [vmem:[%s5 + $0x10] sm:$0xff] %vm901, %v987
  %1033 = vst.msk [vmem:[%s5 + $0x18] sm:$0xff] %vm901, %v989
  %1034 = vst.msk [vmem:[%s5 + $0x20] sm:$0xff] %vm901, %v991
  %1035 = vst.msk [vmem:[%s5 + $0x28] sm:$0xff] %vm901, %v993
  %1036 = vst.msk [vmem:[%s5 + $0x30] sm:$0xff] %vm901, %v995
  %1037 = vst.msk [vmem:[%s5 + $0x38] sm:$0xff] %vm901, %v997
  %1038 = vst.msk [vmem:[%s5 + $0x40] sm:$0xff] %vm901, %v999
  %1039 = vst.msk [vmem:[%s5 + $0x48] sm:$0xff] %vm901, %v1001
  %1040 = vst.msk [vmem:[%s5 + $0x50] sm:$0xff] %vm901, %v1003
  %1041 = vst.msk [vmem:[%s5 + $0x58] sm:$0xff] %vm901, %v1005
  %1042 = vst.msk [vmem:[%s5 + $0x60] sm:$0xff] %vm901, %v1007
  %1043 = vst.msk [vmem:[%s5 + $0x68] sm:$0xff] %vm901, %v1009
  %1044 = vst.msk [vmem:[%s5 + $0x70] sm:$0xff] %vm901, %v1011
  %1045 = vst.msk [vmem:[%s5 + $0x78] sm:$0xff] %vm901, %v1013
  // Predicated region
  $region18: #{tpu_custom_call.1} parent=0 // pred_check
    _
  $region19: #{tpu_custom_call.1} parent=0 // pred_check_branch
    %1047 = sbr.rel (0) target = $region21
  $region20: #{tpu_custom_call.1} parent=0 // pred_region
    _
  $region21: #{tpu_custom_call.1} parent=0 // pred_fallthru
    _
  // Predicated region
  $region22: #{tpu_custom_call.1} parent=0 // pred_check
    _
  $region23: #{tpu_custom_call.1} parent=0 // pred_check_branch
    %1049 = sbr.rel (0) target = $region25
  $region24: #{tpu_custom_call.1} parent=0 // pred_region
    _
  $region25: #{tpu_custom_call.1} parent=0 // pred_fallthru
    _
  // Predicated region
  $region26: #{tpu_custom_call.1} parent=0 // pred_check
    _
  $region27: #{tpu_custom_call.1} parent=0 // pred_check_branch
    %1051 = sbr.rel (0) target = $region29
  $region28: #{tpu_custom_call.1} parent=0 // pred_region
    _
  $region29: #{tpu_custom_call.1} parent=0 // pred_fallthru
    _
  // Predicated region
  $region30: #{tpu_custom_call.1} parent=0 // pred_check
    _
  $region31: #{tpu_custom_call.1} parent=0 // pred_check_branch
    %1053 = sbr.rel (0) target = $region33
  $region32: #{tpu_custom_call.1} parent=0 // pred_region
    _
  $region33: #{tpu_custom_call.1} parent=0 // pred_fallthru
    _

</llo_original>
